<compile_context>
chip_gen: v7x
topology: tpu7x:2x2x1
jax: 0.10.0
libtpu: 0.0.40
codegen_flags: <defaults>
</compile_context>

<pallas_src>
import jax
import jax.numpy as jnp
from jax.experimental import pallas as pl
from jax.experimental.pallas import tpu as pltpu  # noqa: F401  (TPU backend namespace)


def _relu_matmul_sigmoid_kernel(x_ref, w_ref, b_ref, o_ref):
    # x_ref: (M, K) f32   w_ref: (K, C_out) bf16
    # b_ref: (1, C_out) f32   o_ref: (M, C_out) f32
    x = jnp.maximum(x_ref[...], 0.0)                        # ReLU in f32 (VPU)
    y = jnp.dot(x.astype(jnp.bfloat16), w_ref[...],         # bf16 MXU operands,
                preferred_element_type=jnp.float32)         # f32 accumulate
    y = y + b_ref[...]                                      # bias in f32
    # sigmoid(y) = 0.5 * (tanh(y/2) + 1): one EUP transcendental, no divide.
    o_ref[...] = (0.5 * (jnp.tanh(0.5 * y) + 1.0)).astype(o_ref.dtype)


def prepare_conv_params(weight_oi, bias_o):
    """One-time (init) weight/bias prep.

    weight_oi: (C_out, C_in) f32, bias_o: (C_out,) f32.
    Returns ((C_in, C_out) bf16 weight, (1, C_out) f32 bias).  No K padding.
    """
    c_out, c_in = weight_oi.shape
    w_t = jnp.transpose(weight_oi).astype(jnp.bfloat16)     # (C_in, C_out), done ONCE
    return w_t, bias_o.reshape(1, c_out).astype(jnp.float32)


@jax.jit
def relu_conv1x1_sigmoid(x_nchw, w_t_bf16, b2d):
    """x_nchw: (N, C_in, H, W) f32; w_t_bf16: (C_in, C_out) bf16; b2d: (1, C_out) f32."""
    n, c_in, h, w = x_nchw.shape
    k, c_out = w_t_bf16.shape
    m = n * h * w

    # Flatten pixels to rows of C_in.  With H = W = 1 (this module) the NCHW->NHWC
    # transpose is a pure reshape; keep the general path for larger spatial dims.
    if h == 1 and w == 1:
        x_rows = x_nchw.reshape(m, c_in)
    else:
        x_rows = jnp.transpose(x_nchw, (0, 2, 3, 1)).reshape(m, c_in)

    out_rows = pl.pallas_call(
        _relu_matmul_sigmoid_kernel,
        out_shape=jax.ShapeDtypeStruct((m, c_out), x_nchw.dtype),
        in_specs=[
            pl.BlockSpec((m, k), lambda: (0, 0)),
            pl.BlockSpec((k, c_out), lambda: (0, 0)),
            pl.BlockSpec((1, c_out), lambda: (0, 0)),
        ],
        out_specs=pl.BlockSpec((m, c_out), lambda: (0, 0)),
        cost_estimate=pl.CostEstimate(
            flops=2 * m * k * c_out,
            bytes_accessed=(k * c_out * 2            # bf16 weight (dominant)
                            + m * k * 4              # f32 activations in
                            + c_out * 4              # f32 bias
                            + m * c_out * 4),        # f32 output
            transcendentals=m * c_out,
        ),
    )(x_rows, w_t_bf16, b2d)

    # Rows -> NCHW.
    if h == 1 and w == 1:
        return out_rows.reshape(n, c_out, 1, 1)
    return jnp.transpose(out_rows.reshape(n, h, w, c_out), (0, 3, 1, 2))


if __name__ == "__main__":
    key = jax.random.PRNGKey(0)
    k_x, k_w, k_b = jax.random.split(key, 3)

    # Shapes implied by the module: input (1, 224, 1, 1), Conv2d(224, 896, 1x1).
    N, C_IN, H, W = 1, 224, 1, 1
    C_OUT = 896

    x = jax.random.normal(k_x, (N, C_IN, H, W), dtype=jnp.float32)

    # PyTorch Conv2d default init: U(-s, s) with s = 1/sqrt(fan_in)
    fan_in = C_IN * 1 * 1
    s = 1.0 / jnp.sqrt(fan_in)
    weight = jax.random.uniform(k_w, (C_OUT, C_IN), minval=-s, maxval=s, dtype=jnp.float32)
    bias = jax.random.uniform(k_b, (C_OUT,), minval=-s, maxval=s, dtype=jnp.float32)

    # One-time parameter prep (transpose + bf16 cast), then run the kernel.
    w_prepped, b2d = prepare_conv_params(weight, bias)
    out = relu_conv1x1_sigmoid(x, w_prepped, b2d)
    jax.block_until_ready(out)
    assert out.shape == (N, C_OUT, H, W), out.shape

    # --- Reference 1: exact semantics of the original module, f32 weights.
    #     Loose tolerance because the kernel stores/multiplies the weight in bf16.
    x_relu = jnp.maximum(x, 0.0)
    ref_f32 = jnp.einsum("nchw,oc->nohw", x_relu, weight) + bias.reshape(1, C_OUT, 1, 1)
    ref_f32 = 1.0 / (1.0 + jnp.exp(-ref_f32))
    assert jnp.allclose(out, ref_f32, atol=2e-2, rtol=2e-2), "mismatch vs f32 reference"

    # --- Reference 2: bf16-equivalent math (same quantization as the kernel),
    #     tight tolerance -> verifies the kernel computation itself.
    x_rows = jnp.maximum(x.reshape(N * H * W, C_IN), 0.0)
    y_bf = jnp.dot(x_rows.astype(jnp.bfloat16).astype(jnp.float32),
                   weight.T.astype(jnp.bfloat16).astype(jnp.float32)) + bias[None, :]
    ref_bf = 0.5 * (jnp.tanh(0.5 * y_bf) + 1.0)
    ref_bf = ref_bf.reshape(N, C_OUT, H, W)
    assert jnp.allclose(out, ref_bf, atol=1e-4, rtol=1e-4), "mismatch vs bf16-equivalent reference"

    print("KERNEL_OK")
</pallas_src>

<mosaic_0001>
module attributes {stable_mosaic.version = 11 : i64} {
  func.func @_relu_matmul_sigmoid_kernel(%arg0: memref<1x224xf32, #tpu.memory_space<vmem>>, %arg1: memref<224x896xbf16, #tpu.memory_space<vmem>>, %arg2: memref<1x896xf32, #tpu.memory_space<vmem>>, %arg3: memref<1x896xf32, #tpu.memory_space<vmem>>) attributes {dimension_semantics = [], scalar_prefetch = 0 : i64, scratch_operands = 0 : i64, tpu.core_type = #tpu.core_type<tc>} {
    %c0 = arith.constant 0 : index
    %c0_0 = arith.constant 0 : index
    %0 = vector.load %arg0[%c0, %c0_0] : memref<1x224xf32, #tpu.memory_space<vmem>>, vector<1x224xf32>
    %cst = arith.constant 0.000000e+00 : f32
    %1 = vector.broadcast %cst : f32 to vector<1x224xf32>
    %2 = arith.maximumf %0, %1 : vector<1x224xf32>
    %3 = arith.truncf %2 : vector<1x224xf32> to vector<1x224xbf16>
    %c0_1 = arith.constant 0 : index
    %c0_2 = arith.constant 0 : index
    %4 = vector.load %arg1[%c0_1, %c0_2] : memref<224x896xbf16, #tpu.memory_space<vmem>>, vector<224x896xbf16>
    %cst_3 = arith.constant dense<0.000000e+00> : vector<1x896xf32>
    %5 = tpu.matmul %3, %4, %cst_3 {dimension_numbers = #tpu.dot_dimension_numbers<[1], [0], [0], [1], [0, 0, 1, 1], [], []>} : vector<1x224xbf16>, vector<224x896xbf16>, vector<1x896xf32> -> vector<1x896xf32>
    %c0_4 = arith.constant 0 : index
    %c0_5 = arith.constant 0 : index
    %6 = vector.load %arg2[%c0_4, %c0_5] : memref<1x896xf32, #tpu.memory_space<vmem>>, vector<1x896xf32>
    %7 = arith.addf %5, %6 : vector<1x896xf32>
    %cst_6 = arith.constant 5.000000e-01 : f32
    %8 = vector.broadcast %cst_6 : f32 to vector<1x896xf32>
    %9 = arith.mulf %8, %7 : vector<1x896xf32>
    %10 = math.tanh %9 : vector<1x896xf32>
    %cst_7 = arith.constant 1.000000e+00 : f32
    %11 = vector.broadcast %cst_7 : f32 to vector<1x896xf32>
    %12 = arith.addf %10, %11 : vector<1x896xf32>
    %cst_8 = arith.constant 5.000000e-01 : f32
    %13 = vector.broadcast %cst_8 : f32 to vector<1x896xf32>
    %14 = arith.mulf %13, %12 : vector<1x896xf32>
    %c0_9 = arith.constant 0 : index
    %c0_10 = arith.constant 0 : index
    %15 = vector.load %arg3[%c0_9, %c0_10] : memref<1x896xf32, #tpu.memory_space<vmem>>, vector<1x896xf32>
    tpu.vector_store %arg3[%c0_9, %c0_10], %14 {strides = array<i32>} : memref<1x896xf32, #tpu.memory_space<vmem>>, vector<1x896xf32>,
    return
  }
}

</mosaic_0001>

<llo_original>
// kernel: relu_conv1x1_sigmoid.1
$region0: #{relu_conv1x1_sigmoid.1}
  #allocation0 [shape = 'u32[]', space=smem, size = 0x4, offset = 0x4, fixed_abs, tag = 'smem constant byte address 0x4 - core index']
  #allocation1 [shape = 'u32[144,128]{1,0:T(1,128)}', space=vmem, size = 0x12000, scoped, tag = 'internal scratch']
  %s0 = inlined_call_operand.vmem [shape: f32[1,224], index: 0, kind: input, shape index: {}]
  %s1 = inlined_call_operand.hbm [shape: bf16[224,896], index: 1, kind: input, shape index: {}]
  %s2 = inlined_call_operand.vmem [shape: f32[1,896], index: 2, kind: input, shape index: {}]
  %s3 = inlined_call_operand.hbm [shape: f32[1,896], index: 3, kind: output, shape index: {}]
  %s4 = sld [smem:[#allocation0]]
  $region26: #{relu_conv1x1_sigmoid.1} parent=0
    _
  %s6 = ssub.s32 1, %s4
  %s7 = scalar_select 0, %s6, %s4
  $region1: #{relu_conv1x1_sigmoid.1} parent=0
    #allocation2 [shape = 'u8[401408]{0}', space=vmem, size = 0x62000, scoped, tag = 'input window, operand 1, single buffered']
    #allocation3 [shape = 's32[1]{0}', space=sflag, size = 0x4, scoped, tag = 'scoped memory for relu_conv1x1_sigmoid.1']
    #allocation4 [shape = 's32[1]{0}', space=sflag, size = 0x4, scoped, tag = 'scoped memory for relu_conv1x1_sigmoid.1']
    #allocation5 [shape = 'u8[3584]{0}', space=vmem, size = 0x1000, scoped, tag = 'output window, operand 0, single buffered']
    %8 = vsyncpa [#allocation3], 0
    %9 = vsyncpa [#allocation4], 0
    // Predicated region
    $region2: #{relu_conv1x1_sigmoid.1} parent=1 // pred_check
      _
    $region3: #{relu_conv1x1_sigmoid.1} parent=1 // pred_check_branch
      %11 = sbr.rel (0) target = $region5
    $region4: #{relu_conv1x1_sigmoid.1} parent=1 // pred_region
      _
    $region5: #{relu_conv1x1_sigmoid.1} parent=1 // pred_fallthru
      _
    // Predicated region
    $region6: #{relu_conv1x1_sigmoid.1} parent=1 // pred_check
      _
    $region7: #{relu_conv1x1_sigmoid.1} parent=1 // pred_check_branch
      %13 = sbr.rel (0) target = $region9
    $region8: #{relu_conv1x1_sigmoid.1} parent=1 // pred_region
      %s15 = ssub.s32 12544, 12544
      %16 = vsyncadd [#allocation3], %s15
      %s17 = sshll.u32 [#allocation2], 4
      %s18 = int_to_ptr.vmem [resolvable:$true] %s17
      %23 = dma.hbm_to_vmem [thread:$0]  %s1, 12544, %s18, [#allocation3], 448, 448, 28
    $region9: #{relu_conv1x1_sigmoid.1} parent=1 // pred_fallthru
      _
    // Predicated region
    $region10: #{relu_conv1x1_sigmoid.1} parent=1 // pred_check
      _
    $region11: #{relu_conv1x1_sigmoid.1} parent=1 // pred_check_branch
      %25 = sbr.rel (0) target = $region13
    $region12: #{relu_conv1x1_sigmoid.1} parent=1 // pred_region
      _
    $region13: #{relu_conv1x1_sigmoid.1} parent=1 // pred_fallthru
      _
    // Predicated region
    $region14: #{relu_conv1x1_sigmoid.1} parent=1 // pred_check
      _
    $region15: #{relu_conv1x1_sigmoid.1} parent=1 // pred_check_branch
      %27 = sbr.rel (0) target = $region17
    $region16: #{relu_conv1x1_sigmoid.1} parent=1 // pred_region
      %28 = dma.done [#allocation3], 12544
    $region17: #{relu_conv1x1_sigmoid.1} parent=1 // pred_fallthru
      _
    %v30 = vld [vmem:[%s0] sm:$0x3]
    %v31 = vmax.f32 %v30, 0.0
    %v33 = vlaneseq
    %v34 = vshrl.u32 %v33, 7
    %v35 = vsub.s32 0, %v34
    %v36 = vrot.slane %v31, %v35
    %v37 = vlaneseq
    %v38 = vshrl.u32 %v37, 7
    %v39 = vsub.s32 1, %v38
    %v40 = vrot.slane %v31, %v39
    %v43 = vpack.c.bf16 %v36, %v36
    %v44 = vpack.c.bf16 %v40, %v40
    %v45 = vld [vmem:[#allocation2] sm:$0xff]
    %v46 = vld [vmem:[#allocation2 + $0x8] sm:$0xff]
    %v47 = vld [vmem:[#allocation2 + $0x10] sm:$0xff]
    %v48 = vld [vmem:[#allocation2 + $0x18] sm:$0xf]
    %v49 = vld [vmem:[#allocation2 + $0x1c] sm:$0xff]
    %v50 = vld [vmem:[#allocation2 + $0x24] sm:$0xff]
    %v51 = vld [vmem:[#allocation2 + $0x2c] sm:$0xff]
    %v52 = vld [vmem:[#allocation2 + $0x34] sm:$0xf]
    %v53 = vld [vmem:[#allocation2 + $0x38] sm:$0xff]
    %v54 = vld [vmem:[#allocation2 + $0x40] sm:$0xff]
    %v55 = vld [vmem:[#allocation2 + $0x48] sm:$0xff]
    %v56 = vld [vmem:[#allocation2 + $0x50] sm:$0xf]
    %v57 = vld [vmem:[#allocation2 + $0x54] sm:$0xff]
    %v58 = vld [vmem:[#allocation2 + $0x5c] sm:$0xff]
    %v59 = vld [vmem:[#allocation2 + $0x64] sm:$0xff]
    %v60 = vld [vmem:[#allocation2 + $0x6c] sm:$0xf]
    %v61 = vld [vmem:[#allocation2 + $0x70] sm:$0xff]
    %v62 = vld [vmem:[#allocation2 + $0x78] sm:$0xff]
    %v63 = vld [vmem:[#allocation2 + $0x80] sm:$0xff]
    %v64 = vld [vmem:[#allocation2 + $0x88] sm:$0xf]
    %v65 = vld [vmem:[#allocation2 + $0x8c] sm:$0xff]
    %v66 = vld [vmem:[#allocation2 + $0x94] sm:$0xff]
    %v67 = vld [vmem:[#allocation2 + $0x9c] sm:$0xff]
    %v68 = vld [vmem:[#allocation2 + $0xa4] sm:$0xf]
    %v69 = vld [vmem:[#allocation2 + $0xa8] sm:$0xff]
    %v70 = vld [vmem:[#allocation2 + $0xb0] sm:$0xff]
    %v71 = vld [vmem:[#allocation2 + $0xb8] sm:$0xff]
    %v72 = vld [vmem:[#allocation2 + $0xc0] sm:$0xf]
    %v73 = vld [vmem:[#allocation2 + $0xc4] sm:$0xff]
    %v74 = vld [vmem:[#allocation2 + $0xcc] sm:$0xff]
    %v75 = vld [vmem:[#allocation2 + $0xd4] sm:$0xff]
    %v76 = vld [vmem:[#allocation2 + $0xdc] sm:$0xf]
    %v77 = vld [vmem:[#allocation2 + $0xe0] sm:$0xff]
    %v78 = vld [vmem:[#allocation2 + $0xe8] sm:$0xff]
    %v79 = vld [vmem:[#allocation2 + $0xf0] sm:$0xff]
    %v80 = vld [vmem:[#allocation2 + $0xf8] sm:$0xf]
    %v81 = vld [vmem:[#allocation2 + $0xfc] sm:$0xff]
    %v82 = vld [vmem:[#allocation2 + $0x104] sm:$0xff]
    %v83 = vld [vmem:[#allocation2 + $0x10c] sm:$0xff]
    %v84 = vld [vmem:[#allocation2 + $0x114] sm:$0xf]
    %v85 = vld [vmem:[#allocation2 + $0x118] sm:$0xff]
    %v86 = vld [vmem:[#allocation2 + $0x120] sm:$0xff]
    %v87 = vld [vmem:[#allocation2 + $0x128] sm:$0xff]
    %v88 = vld [vmem:[#allocation2 + $0x130] sm:$0xf]
    %v89 = vld [vmem:[#allocation2 + $0x134] sm:$0xff]
    %v90 = vld [vmem:[#allocation2 + $0x13c] sm:$0xff]
    %v91 = vld [vmem:[#allocation2 + $0x144] sm:$0xff]
    %v92 = vld [vmem:[#allocation2 + $0x14c] sm:$0xf]
    %v93 = vld [vmem:[#allocation2 + $0x150] sm:$0xff]
    %v94 = vld [vmem:[#allocation2 + $0x158] sm:$0xff]
    %v95 = vld [vmem:[#allocation2 + $0x160] sm:$0xff]
    %v96 = vld [vmem:[#allocation2 + $0x168] sm:$0xf]
    %v97 = vld [vmem:[#allocation2 + $0x16c] sm:$0xff]
    %v98 = vld [vmem:[#allocation2 + $0x174] sm:$0xff]
    %v99 = vld [vmem:[#allocation2 + $0x17c] sm:$0xff]
    %v100 = vld [vmem:[#allocation2 + $0x184] sm:$0xf]
    %v101 = vld [vmem:[#allocation2 + $0x188] sm:$0xff]
    %v102 = vld [vmem:[#allocation2 + $0x190] sm:$0xff]
    %v103 = vld [vmem:[#allocation2 + $0x198] sm:$0xff]
    %v104 = vld [vmem:[#allocation2 + $0x1a0] sm:$0xf]
    %v105 = vld [vmem:[#allocation2 + $0x1a4] sm:$0xff]
    %v106 = vld [vmem:[#allocation2 + $0x1ac] sm:$0xff]
    %v107 = vld [vmem:[#allocation2 + $0x1b4] sm:$0xff]
    %v108 = vld [vmem:[#allocation2 + $0x1bc] sm:$0xf]
    %v109 = vld [vmem:[#allocation2 + $0x1c0] sm:$0xff]
    %v110 = vld [vmem:[#allocation2 + $0x1c8] sm:$0xff]
    %v111 = vld [vmem:[#allocation2 + $0x1d0] sm:$0xff]
    %v112 = vld [vmem:[#allocation2 + $0x1d8] sm:$0xf]
    %v113 = vld [vmem:[#allocation2 + $0x1dc] sm:$0xff]
    %v114 = vld [vmem:[#allocation2 + $0x1e4] sm:$0xff]
    %v115 = vld [vmem:[#allocation2 + $0x1ec] sm:$0xff]
    %v116 = vld [vmem:[#allocation2 + $0x1f4] sm:$0xf]
    %v117 = vld [vmem:[#allocation2 + $0x1f8] sm:$0xff]
    %v118 = vld [vmem:[#allocation2 + $0x200] sm:$0xff]
    %v119 = vld [vmem:[#allocation2 + $0x208] sm:$0xff]
    %v120 = vld [vmem:[#allocation2 + $0x210] sm:$0xf]
    %v121 = vld [vmem:[#allocation2 + $0x214] sm:$0xff]
    %v122 = vld [vmem:[#allocation2 + $0x21c] sm:$0xff]
    %v123 = vld [vmem:[#allocation2 + $0x224] sm:$0xff]
    %v124 = vld [vmem:[#allocation2 + $0x22c] sm:$0xf]
    %v125 = vld [vmem:[#allocation2 + $0x230] sm:$0xff]
    %v126 = vld [vmem:[#allocation2 + $0x238] sm:$0xff]
    %v127 = vld [vmem:[#allocation2 + $0x240] sm:$0xff]
    %v128 = vld [vmem:[#allocation2 + $0x248] sm:$0xf]
    %v129 = vld [vmem:[#allocation2 + $0x24c] sm:$0xff]
    %v130 = vld [vmem:[#allocation2 + $0x254] sm:$0xff]
    %v131 = vld [vmem:[#allocation2 + $0x25c] sm:$0xff]
    %v132 = vld [vmem:[#allocation2 + $0x264] sm:$0xf]
    %v133 = vld [vmem:[#allocation2 + $0x268] sm:$0xff]
    %v134 = vld [vmem:[#allocation2 + $0x270] sm:$0xff]
    %v135 = vld [vmem:[#allocation2 + $0x278] sm:$0xff]
    %v136 = vld [vmem:[#allocation2 + $0x280] sm:$0xf]
    %v137 = vld [vmem:[#allocation2 + $0x284] sm:$0xff]
    %v138 = vld [vmem:[#allocation2 + $0x28c] sm:$0xff]
    %v139 = vld [vmem:[#allocation2 + $0x294] sm:$0xff]
    %v140 = vld [vmem:[#allocation2 + $0x29c] sm:$0xf]
    %v141 = vld [vmem:[#allocation2 + $0x2a0] sm:$0xff]
    %v142 = vld [vmem:[#allocation2 + $0x2a8] sm:$0xff]
    %v143 = vld [vmem:[#allocation2 + $0x2b0] sm:$0xff]
    %v144 = vld [vmem:[#allocation2 + $0x2b8] sm:$0xf]
    %v145 = vld [vmem:[#allocation2 + $0x2bc] sm:$0xff]
    %v146 = vld [vmem:[#allocation2 + $0x2c4] sm:$0xff]
    %v147 = vld [vmem:[#allocation2 + $0x2cc] sm:$0xff]
    %v148 = vld [vmem:[#allocation2 + $0x2d4] sm:$0xf]
    %v149 = vld [vmem:[#allocation2 + $0x2d8] sm:$0xff]
    %v150 = vld [vmem:[#allocation2 + $0x2e0] sm:$0xff]
    %v151 = vld [vmem:[#allocation2 + $0x2e8] sm:$0xff]
    %v152 = vld [vmem:[#allocation2 + $0x2f0] sm:$0xf]
    %v153 = vld [vmem:[#allocation2 + $0x2f4] sm:$0xff]
    %v154 = vld [vmem:[#allocation2 + $0x2fc] sm:$0xff]
    %v155 = vld [vmem:[#allocation2 + $0x304] sm:$0xff]
    %v156 = vld [vmem:[#allocation2 + $0x30c] sm:$0xf]
    %v157 = vld [vmem:[%s2] sm:$0xff]
    %v270 = vunpack.c.l.b16 %v45
    %v271 = vunpack.c.h.b16 %v45
    %v272 = vunpack.c.l.b16 %v46
    %v273 = vunpack.c.h.b16 %v46
    %v274 = vunpack.c.l.b16 %v47
    %v275 = vunpack.c.h.b16 %v47
    %v276 = vunpack.c.l.b16 %v48
    %v277 = vunpack.c.l.b16 %v49
    %v278 = vunpack.c.h.b16 %v49
    %v279 = vunpack.c.l.b16 %v50
    %v280 = vunpack.c.h.b16 %v50
    %v281 = vunpack.c.l.b16 %v51
    %v282 = vunpack.c.h.b16 %v51
    %v283 = vunpack.c.l.b16 %v52
    %v284 = vunpack.c.l.b16 %v53
    %v285 = vunpack.c.h.b16 %v53
    %v286 = vunpack.c.l.b16 %v54
    %v287 = vunpack.c.h.b16 %v54
    %v288 = vunpack.c.l.b16 %v55
    %v289 = vunpack.c.h.b16 %v55
    %v290 = vunpack.c.l.b16 %v56
    %v291 = vunpack.c.l.b16 %v57
    %v292 = vunpack.c.h.b16 %v57
    %v293 = vunpack.c.l.b16 %v58
    %v294 = vunpack.c.h.b16 %v58
    %v295 = vunpack.c.l.b16 %v59
    %v296 = vunpack.c.h.b16 %v59
    %v297 = vunpack.c.l.b16 %v60
    %v298 = vunpack.c.l.b16 %v61
    %v299 = vunpack.c.h.b16 %v61
    %v300 = vunpack.c.l.b16 %v62
    %v301 = vunpack.c.h.b16 %v62
    %v302 = vunpack.c.l.b16 %v63
    %v303 = vunpack.c.h.b16 %v63
    %v304 = vunpack.c.l.b16 %v64
    %v305 = vunpack.c.l.b16 %v65
    %v306 = vunpack.c.h.b16 %v65
    %v307 = vunpack.c.l.b16 %v66
    %v308 = vunpack.c.h.b16 %v66
    %v309 = vunpack.c.l.b16 %v67
    %v310 = vunpack.c.h.b16 %v67
    %v311 = vunpack.c.l.b16 %v68
    %v312 = vunpack.c.l.b16 %v69
    %v313 = vunpack.c.h.b16 %v69
    %v314 = vunpack.c.l.b16 %v70
    %v315 = vunpack.c.h.b16 %v70
    %v316 = vunpack.c.l.b16 %v71
    %v317 = vunpack.c.h.b16 %v71
    %v318 = vunpack.c.l.b16 %v72
    %v319 = vunpack.c.l.b16 %v73
    %v320 = vunpack.c.h.b16 %v73
    %v321 = vunpack.c.l.b16 %v74
    %v322 = vunpack.c.h.b16 %v74
    %v323 = vunpack.c.l.b16 %v75
    %v324 = vunpack.c.h.b16 %v75
    %v325 = vunpack.c.l.b16 %v76
    %v326 = vunpack.c.l.b16 %v77
    %v327 = vunpack.c.h.b16 %v77
    %v328 = vunpack.c.l.b16 %v78
    %v329 = vunpack.c.h.b16 %v78
    %v330 = vunpack.c.l.b16 %v79
    %v331 = vunpack.c.h.b16 %v79
    %v332 = vunpack.c.l.b16 %v80
    %v333 = vunpack.c.l.b16 %v81
    %v334 = vunpack.c.h.b16 %v81
    %v335 = vunpack.c.l.b16 %v82
    %v336 = vunpack.c.h.b16 %v82
    %v337 = vunpack.c.l.b16 %v83
    %v338 = vunpack.c.h.b16 %v83
    %v339 = vunpack.c.l.b16 %v84
    %v340 = vunpack.c.l.b16 %v85
    %v341 = vunpack.c.h.b16 %v85
    %v342 = vunpack.c.l.b16 %v86
    %v343 = vunpack.c.h.b16 %v86
    %v344 = vunpack.c.l.b16 %v87
    %v345 = vunpack.c.h.b16 %v87
    %v346 = vunpack.c.l.b16 %v88
    %v347 = vunpack.c.l.b16 %v89
    %v348 = vunpack.c.h.b16 %v89
    %v349 = vunpack.c.l.b16 %v90
    %v350 = vunpack.c.h.b16 %v90
    %v351 = vunpack.c.l.b16 %v91
    %v352 = vunpack.c.h.b16 %v91
    %v353 = vunpack.c.l.b16 %v92
    %v354 = vunpack.c.l.b16 %v93
    %v355 = vunpack.c.h.b16 %v93
    %v356 = vunpack.c.l.b16 %v94
    %v357 = vunpack.c.h.b16 %v94
    %v358 = vunpack.c.l.b16 %v95
    %v359 = vunpack.c.h.b16 %v95
    %v360 = vunpack.c.l.b16 %v96
    %v361 = vunpack.c.l.b16 %v97
    %v362 = vunpack.c.h.b16 %v97
    %v363 = vunpack.c.l.b16 %v98
    %v364 = vunpack.c.h.b16 %v98
    %v365 = vunpack.c.l.b16 %v99
    %v366 = vunpack.c.h.b16 %v99
    %v367 = vunpack.c.l.b16 %v100
    %v368 = vunpack.c.l.b16 %v101
    %v369 = vunpack.c.h.b16 %v101
    %v370 = vunpack.c.l.b16 %v102
    %v371 = vunpack.c.h.b16 %v102
    %v372 = vunpack.c.l.b16 %v103
    %v373 = vunpack.c.h.b16 %v103
    %v374 = vunpack.c.l.b16 %v104
    %v375 = vunpack.c.l.b16 %v105
    %v376 = vunpack.c.h.b16 %v105
    %v377 = vunpack.c.l.b16 %v106
    %v378 = vunpack.c.h.b16 %v106
    %v379 = vunpack.c.l.b16 %v107
    %v380 = vunpack.c.h.b16 %v107
    %v381 = vunpack.c.l.b16 %v108
    %v382 = vunpack.c.l.b16 %v109
    %v383 = vunpack.c.h.b16 %v109
    %v384 = vunpack.c.l.b16 %v110
    %v385 = vunpack.c.h.b16 %v110
    %v386 = vunpack.c.l.b16 %v111
    %v387 = vunpack.c.h.b16 %v111
    %v388 = vunpack.c.l.b16 %v112
    %v389 = vunpack.c.l.b16 %v113
    %v390 = vunpack.c.h.b16 %v113
    %v391 = vunpack.c.l.b16 %v114
    %v392 = vunpack.c.h.b16 %v114
    %v393 = vunpack.c.l.b16 %v115
    %v394 = vunpack.c.h.b16 %v115
    %v395 = vunpack.c.l.b16 %v116
    %v396 = vunpack.c.l.b16 %v117
    %v397 = vunpack.c.h.b16 %v117
    %v398 = vunpack.c.l.b16 %v118
    %v399 = vunpack.c.h.b16 %v118
    %v400 = vunpack.c.l.b16 %v119
    %v401 = vunpack.c.h.b16 %v119
    %v402 = vunpack.c.l.b16 %v120
    %v403 = vunpack.c.l.b16 %v121
    %v404 = vunpack.c.h.b16 %v121
    %v405 = vunpack.c.l.b16 %v122
    %v406 = vunpack.c.h.b16 %v122
    %v407 = vunpack.c.l.b16 %v123
    %v408 = vunpack.c.h.b16 %v123
    %v409 = vunpack.c.l.b16 %v124
    %v410 = vunpack.c.l.b16 %v125
    %v411 = vunpack.c.h.b16 %v125
    %v412 = vunpack.c.l.b16 %v126
    %v413 = vunpack.c.h.b16 %v126
    %v414 = vunpack.c.l.b16 %v127
    %v415 = vunpack.c.h.b16 %v127
    %v416 = vunpack.c.l.b16 %v128
    %v417 = vunpack.c.l.b16 %v129
    %v418 = vunpack.c.h.b16 %v129
    %v419 = vunpack.c.l.b16 %v130
    %v420 = vunpack.c.h.b16 %v130
    %v421 = vunpack.c.l.b16 %v131
    %v422 = vunpack.c.h.b16 %v131
    %v423 = vunpack.c.l.b16 %v132
    %v424 = vunpack.c.l.b16 %v133
    %v425 = vunpack.c.h.b16 %v133
    %v426 = vunpack.c.l.b16 %v134
    %v427 = vunpack.c.h.b16 %v134
    %v428 = vunpack.c.l.b16 %v135
    %v429 = vunpack.c.h.b16 %v135
    %v430 = vunpack.c.l.b16 %v136
    %v431 = vunpack.c.l.b16 %v137
    %v432 = vunpack.c.h.b16 %v137
    %v433 = vunpack.c.l.b16 %v138
    %v434 = vunpack.c.h.b16 %v138
    %v435 = vunpack.c.l.b16 %v139
    %v436 = vunpack.c.h.b16 %v139
    %v437 = vunpack.c.l.b16 %v140
    %v438 = vunpack.c.l.b16 %v141
    %v439 = vunpack.c.h.b16 %v141
    %v440 = vunpack.c.l.b16 %v142
    %v441 = vunpack.c.h.b16 %v142
    %v442 = vunpack.c.l.b16 %v143
    %v443 = vunpack.c.h.b16 %v143
    %v444 = vunpack.c.l.b16 %v144
    %v445 = vunpack.c.l.b16 %v145
    %v446 = vunpack.c.h.b16 %v145
    %v447 = vunpack.c.l.b16 %v146
    %v448 = vunpack.c.h.b16 %v146
    %v449 = vunpack.c.l.b16 %v147
    %v450 = vunpack.c.h.b16 %v147
    %v451 = vunpack.c.l.b16 %v148
    %v452 = vunpack.c.l.b16 %v149
    %v453 = vunpack.c.h.b16 %v149
    %v454 = vunpack.c.l.b16 %v150
    %v455 = vunpack.c.h.b16 %v150
    %v456 = vunpack.c.l.b16 %v151
    %v457 = vunpack.c.h.b16 %v151
    %v458 = vunpack.c.l.b16 %v152
    %v459 = vunpack.c.l.b16 %v153
    %v460 = vunpack.c.h.b16 %v153
    %v461 = vunpack.c.l.b16 %v154
    %v462 = vunpack.c.h.b16 %v154
    %v463 = vunpack.c.l.b16 %v155
    %v464 = vunpack.c.h.b16 %v155
    %v465 = vunpack.c.l.b16 %v156
    %v466 = vpack.c.b16 %v277, %v270
    %v467 = vpack.c.b16 %v278, %v271
    %v468 = vpack.c.b16 %v279, %v272
    %v469 = vpack.c.b16 %v280, %v273
    %v470 = vpack.c.b16 %v281, %v274
    %v471 = vpack.c.b16 %v282, %v275
    %v472 = vpack.c.b16 %v283, %v276
    %v473 = vpack.c.b16 %v291, %v284
    %v474 = vpack.c.b16 %v292, %v285
    %v475 = vpack.c.b16 %v293, %v286
    %v476 = vpack.c.b16 %v294, %v287
    %v477 = vpack.c.b16 %v295, %v288
    %v478 = vpack.c.b16 %v296, %v289
    %v479 = vpack.c.b16 %v297, %v290
    %v480 = vpack.c.b16 %v305, %v298
    %v481 = vpack.c.b16 %v306, %v299
    %v482 = vpack.c.b16 %v307, %v300
    %v483 = vpack.c.b16 %v308, %v301
    %v484 = vpack.c.b16 %v309, %v302
    %v485 = vpack.c.b16 %v310, %v303
    %v486 = vpack.c.b16 %v311, %v304
    %v487 = vpack.c.b16 %v319, %v312
    %v488 = vpack.c.b16 %v320, %v313
    %v489 = vpack.c.b16 %v321, %v314
    %v490 = vpack.c.b16 %v322, %v315
    %v491 = vpack.c.b16 %v323, %v316
    %v492 = vpack.c.b16 %v324, %v317
    %v493 = vpack.c.b16 %v325, %v318
    %v494 = vpack.c.b16 %v333, %v326
    %v495 = vpack.c.b16 %v334, %v327
    %v496 = vpack.c.b16 %v335, %v328
    %v497 = vpack.c.b16 %v336, %v329
    %v498 = vpack.c.b16 %v337, %v330
    %v499 = vpack.c.b16 %v338, %v331
    %v500 = vpack.c.b16 %v339, %v332
    %v501 = vpack.c.b16 %v347, %v340
    %v502 = vpack.c.b16 %v348, %v341
    %v503 = vpack.c.b16 %v349, %v342
    %v504 = vpack.c.b16 %v350, %v343
    %v505 = vpack.c.b16 %v351, %v344
    %v506 = vpack.c.b16 %v352, %v345
    %v507 = vpack.c.b16 %v353, %v346
    %v508 = vpack.c.b16 %v361, %v354
    %v509 = vpack.c.b16 %v362, %v355
    %v510 = vpack.c.b16 %v363, %v356
    %v511 = vpack.c.b16 %v364, %v357
    %v512 = vpack.c.b16 %v365, %v358
    %v513 = vpack.c.b16 %v366, %v359
    %v514 = vpack.c.b16 %v367, %v360
    %v515 = vpack.c.b16 %v375, %v368
    %v516 = vpack.c.b16 %v376, %v369
    %v517 = vpack.c.b16 %v377, %v370
    %v518 = vpack.c.b16 %v378, %v371
    %v519 = vpack.c.b16 %v379, %v372
    %v520 = vpack.c.b16 %v380, %v373
    %v521 = vpack.c.b16 %v381, %v374
    %v522 = vpack.c.b16 %v389, %v382
    %v523 = vpack.c.b16 %v390, %v383
    %v524 = vpack.c.b16 %v391, %v384
    %v525 = vpack.c.b16 %v392, %v385
    %v526 = vpack.c.b16 %v393, %v386
    %v527 = vpack.c.b16 %v394, %v387
    %v528 = vpack.c.b16 %v395, %v388
    %v529 = vpack.c.b16 %v403, %v396
    %v530 = vpack.c.b16 %v404, %v397
    %v531 = vpack.c.b16 %v405, %v398
    %v532 = vpack.c.b16 %v406, %v399
    %v533 = vpack.c.b16 %v407, %v400
    %v534 = vpack.c.b16 %v408, %v401
    %v535 = vpack.c.b16 %v409, %v402
    %v536 = vpack.c.b16 %v417, %v410
    %v537 = vpack.c.b16 %v418, %v411
    %v538 = vpack.c.b16 %v419, %v412
    %v539 = vpack.c.b16 %v420, %v413
    %v540 = vpack.c.b16 %v421, %v414
    %v541 = vpack.c.b16 %v422, %v415
    %v542 = vpack.c.b16 %v423, %v416
    %v543 = vpack.c.b16 %v431, %v424
    %v544 = vpack.c.b16 %v432, %v425
    %v545 = vpack.c.b16 %v433, %v426
    %v546 = vpack.c.b16 %v434, %v427
    %v547 = vpack.c.b16 %v435, %v428
    %v548 = vpack.c.b16 %v436, %v429
    %v549 = vpack.c.b16 %v437, %v430
    %v550 = vpack.c.b16 %v445, %v438
    %v551 = vpack.c.b16 %v446, %v439
    %v552 = vpack.c.b16 %v447, %v440
    %v553 = vpack.c.b16 %v448, %v441
    %v554 = vpack.c.b16 %v449, %v442
    %v555 = vpack.c.b16 %v450, %v443
    %v556 = vpack.c.b16 %v451, %v444
    %v557 = vpack.c.b16 %v459, %v452
    %v558 = vpack.c.b16 %v460, %v453
    %v559 = vpack.c.b16 %v461, %v454
    %v560 = vpack.c.b16 %v462, %v455
    %v561 = vpack.c.b16 %v463, %v456
    %v562 = vpack.c.b16 %v464, %v457
    %v563 = vpack.c.b16 %v465, %v458
    %v663 = vlaneseq
    %v664 = vshrl.u32 %v663, 7
    %v665 = vsub.s32 0, %v664
    %v666 = vrot.slane %v157, %v665
    %v667 = vlaneseq
    %v668 = vshrl.u32 %v667, 7
    %v669 = vsub.s32 1, %v668
    %v670 = vrot.slane %v157, %v669
    %v671 = vlaneseq
    %v672 = vshrl.u32 %v671, 7
    %v673 = vsub.s32 2, %v672
    %v674 = vrot.slane %v157, %v673
    %v675 = vlaneseq
    %v676 = vshrl.u32 %v675, 7
    %v677 = vsub.s32 3, %v676
    %v678 = vrot.slane %v157, %v677
    %v679 = vlaneseq
    %v680 = vshrl.u32 %v679, 7
    %v681 = vsub.s32 4, %v680
    %v682 = vrot.slane %v157, %v681
    %v683 = vlaneseq
    %v684 = vshrl.u32 %v683, 7
    %v685 = vsub.s32 5, %v684
    %v686 = vrot.slane %v157, %v685
    %v687 = vlaneseq
    %v688 = vshrl.u32 %v687, 7
    %v689 = vsub.s32 6, %v688
    %v690 = vrot.slane %v157, %v689
    %vm698 = vcmask 785408
    %v700 = vsel %vm698, %v44, 0
    %702 = vmatprep.subr.bf16.mxu0 %v467
    %703 = vmatpush1.bf16.msra.mxu0 %v466
    %704 = vmatprep.subr.bf16.mxu0 %v474
    %705 = vmatpush1.bf16.msra.mxu0 %v473
    %706 = vmatprep.subr.bf16.mxu0 %v481
    %707 = vmatpush1.bf16.msra.mxu0 %v480
    %708 = vmatprep.subr.bf16.mxu0 %v488
    %709 = vmatpush1.bf16.msra.mxu0 %v487
    %710 = vmatprep.subr.bf16.mxu0 %v495
    %711 = vmatpush1.bf16.msra.mxu0 %v494
    %712 = vmatprep.subr.bf16.mxu0 %v502
    %713 = vmatpush1.bf16.msra.mxu0 %v501
    %714 = vmatprep.subr.bf16.mxu0 %v509
    %715 = vmatpush1.bf16.msra.mxu0 %v508
    %716 = vmatprep.subr.bf16.mxu0 %v516
    %717 = vmatpush1.bf16.msra.mxu0 %v515
    %718 = vmatprep.subr.bf16.mxu0 %v523
    %719 = vmatpush1.bf16.msra.mxu0 %v522
    %720 = vmatprep.subr.bf16.mxu0 %v530
    %721 = vmatpush1.bf16.msra.mxu0 %v529
    %722 = vmatprep.subr.bf16.mxu0 %v537
    %723 = vmatpush1.bf16.msra.mxu0 %v536
    %724 = vmatprep.subr.bf16.mxu0 %v544
    %725 = vmatpush1.bf16.msra.mxu0 %v543
    %726 = vmatprep.subr.bf16.mxu0 %v551
    %727 = vmatpush1.bf16.msra.mxu0 %v550
    %728 = vmatprep.subr.bf16.mxu0 %v558
    %729 = vmatpush1.bf16.msra.mxu0 %v557
    %730 = vmatprep.subr.bf16.mxu0 0
    %731 = vmatpush1.bf16.msra.mxu0 0
    %732 = vmatprep.subr.bf16.mxu0 0
    %733 = vmatpush1.bf16.msra.mxu0 0
    %734 = vmatprep.mubr.bf16.mxu0 %v700
    %735 = vmatmul.mubr.bf16.gmra.mrb[0].mxu0 %v43
    %v736 = vpop.f32.mrb[0].mxu0
    %v737 = vadd.f32 %v666, %v736
    %v738 = vpop.f32.mrb[0].mxu0
    %v739 = vadd.f32 %v670, %v738
    %v740 = vpop.f32.mrb[0].mxu0
    %v741 = vpop.f32.mrb[0].mxu0
    %742 = vdwg.mxu0
    %743 = vmatprep.subr.bf16.mxu0 %v469
    %744 = vmatpush1.bf16.msra.mxu0 %v468
    %745 = vmatprep.subr.bf16.mxu0 %v476
    %746 = vmatpush1.bf16.msra.mxu0 %v475
    %747 = vmatprep.subr.bf16.mxu0 %v483
    %748 = vmatpush1.bf16.msra.mxu0 %v482
    %749 = vmatprep.subr.bf16.mxu0 %v490
    %750 = vmatpush1.bf16.msra.mxu0 %v489
    %751 = vmatprep.subr.bf16.mxu0 %v497
    %752 = vmatpush1.bf16.msra.mxu0 %v496
    %753 = vmatprep.subr.bf16.mxu0 %v504
    %754 = vmatpush1.bf16.msra.mxu0 %v503
    %755 = vmatprep.subr.bf16.mxu0 %v511
    %756 = vmatpush1.bf16.msra.mxu0 %v510
    %757 = vmatprep.subr.bf16.mxu0 %v518
    %758 = vmatpush1.bf16.msra.mxu0 %v517
    %759 = vmatprep.subr.bf16.mxu0 %v525
    %760 = vmatpush1.bf16.msra.mxu0 %v524
    %761 = vmatprep.subr.bf16.mxu0 %v532
    %762 = vmatpush1.bf16.msra.mxu0 %v531
    %763 = vmatprep.subr.bf16.mxu0 %v539
    %764 = vmatpush1.bf16.msra.mxu0 %v538
    %765 = vmatprep.subr.bf16.mxu0 %v546
    %766 = vmatpush1.bf16.msra.mxu0 %v545
    %767 = vmatprep.subr.bf16.mxu0 %v553
    %768 = vmatpush1.bf16.msra.mxu0 %v552
    %769 = vmatprep.subr.bf16.mxu0 %v560
    %770 = vmatpush1.bf16.msra.mxu0 %v559
    %771 = vmatprep.subr.bf16.mxu0 0
    %772 = vmatpush1.bf16.msra.mxu0 0
    %773 = vmatprep.subr.bf16.mxu0 0
    %774 = vmatpush1.bf16.msra.mxu0 0
    %775 = vmatprep.mubr.bf16.mxu0 %v700
    %776 = vmatmul.mubr.bf16.gmra.mrb[0].mxu0 %v43
    %v777 = vpop.f32.mrb[0].mxu0
    %v778 = vadd.f32 %v674, %v777
    %v779 = vpop.f32.mrb[0].mxu0
    %v780 = vadd.f32 %v678, %v779
    %v781 = vpop.f32.mrb[0].mxu0
    %v782 = vpop.f32.mrb[0].mxu0
    %783 = vdwg.mxu0
    %784 = vmatprep.subr.bf16.mxu0 %v471
    %785 = vmatpush1.bf16.msra.mxu0 %v470
    %786 = vmatprep.subr.bf16.mxu0 %v478
    %787 = vmatpush1.bf16.msra.mxu0 %v477
    %788 = vmatprep.subr.bf16.mxu0 %v485
    %789 = vmatpush1.bf16.msra.mxu0 %v484
    %790 = vmatprep.subr.bf16.mxu0 %v492
    %791 = vmatpush1.bf16.msra.mxu0 %v491
    %792 = vmatprep.subr.bf16.mxu0 %v499
    %793 = vmatpush1.bf16.msra.mxu0 %v498
    %794 = vmatprep.subr.bf16.mxu0 %v506
    %795 = vmatpush1.bf16.msra.mxu0 %v505
    %796 = vmatprep.subr.bf16.mxu0 %v513
    %797 = vmatpush1.bf16.msra.mxu0 %v512
    %798 = vmatprep.subr.bf16.mxu0 %v520
    %799 = vmatpush1.bf16.msra.mxu0 %v519
    %800 = vmatprep.subr.bf16.mxu0 %v527
    %801 = vmatpush1.bf16.msra.mxu0 %v526
    %802 = vmatprep.subr.bf16.mxu0 %v534
    %803 = vmatpush1.bf16.msra.mxu0 %v533
    %804 = vmatprep.subr.bf16.mxu0 %v541
    %805 = vmatpush1.bf16.msra.mxu0 %v540
    %806 = vmatprep.subr.bf16.mxu0 %v548
    %807 = vmatpush1.bf16.msra.mxu0 %v547
    %808 = vmatprep.subr.bf16.mxu0 %v555
    %809 = vmatpush1.bf16.msra.mxu0 %v554
    %810 = vmatprep.subr.bf16.mxu0 %v562
    %811 = vmatpush1.bf16.msra.mxu0 %v561
    %812 = vmatprep.subr.bf16.mxu0 0
    %813 = vmatpush1.bf16.msra.mxu0 0
    %814 = vmatprep.subr.bf16.mxu0 0
    %815 = vmatpush1.bf16.msra.mxu0 0
    %816 = vmatprep.mubr.bf16.mxu0 %v700
    %817 = vmatmul.mubr.bf16.gmra.mrb[0].mxu0 %v43
    %v818 = vpop.f32.mrb[0].mxu0
    %v819 = vadd.f32 %v682, %v818
    %v820 = vpop.f32.mrb[0].mxu0
    %v821 = vadd.f32 %v686, %v820
    %v822 = vpop.f32.mrb[0].mxu0
    %v823 = vpop.f32.mrb[0].mxu0
    %824 = vdwg.mxu0
    %825 = vmatprep.subr.bf16.mxu0 0
    %826 = vmatpush1.bf16.msra.mxu0 %v472
    %827 = vmatprep.subr.bf16.mxu0 0
    %828 = vmatpush1.bf16.msra.mxu0 %v479
    %829 = vmatprep.subr.bf16.mxu0 0
    %830 = vmatpush1.bf16.msra.mxu0 %v486
    %831 = vmatprep.subr.bf16.mxu0 0
    %832 = vmatpush1.bf16.msra.mxu0 %v493
    %833 = vmatprep.subr.bf16.mxu0 0
    %834 = vmatpush1.bf16.msra.mxu0 %v500
    %835 = vmatprep.subr.bf16.mxu0 0
    %836 = vmatpush1.bf16.msra.mxu0 %v507
    %837 = vmatprep.subr.bf16.mxu0 0
    %838 = vmatpush1.bf16.msra.mxu0 %v514
    %839 = vmatprep.subr.bf16.mxu0 0
    %840 = vmatpush1.bf16.msra.mxu0 %v521
    %841 = vmatprep.subr.bf16.mxu0 0
    %842 = vmatpush1.bf16.msra.mxu0 %v528
    %843 = vmatprep.subr.bf16.mxu0 0
    %844 = vmatpush1.bf16.msra.mxu0 %v535
    %845 = vmatprep.subr.bf16.mxu0 0
    %846 = vmatpush1.bf16.msra.mxu0 %v542
    %847 = vmatprep.subr.bf16.mxu0 0
    %848 = vmatpush1.bf16.msra.mxu0 %v549
    %849 = vmatprep.subr.bf16.mxu0 0
    %850 = vmatpush1.bf16.msra.mxu0 %v556
    %851 = vmatprep.subr.bf16.mxu0 0
    %852 = vmatpush1.bf16.msra.mxu0 %v563
    %853 = vmatprep.subr.bf16.mxu0 0
    %854 = vmatpush1.bf16.msra.mxu0 0
    %855 = vmatprep.subr.bf16.mxu0 0
    %856 = vmatpush1.bf16.msra.mxu0 0
    %857 = vmatprep.mubr.bf16.mxu0 %v700
    %858 = vmatmul.mubr.bf16.gmra.mrb[0].mxu0 %v43
    %v859 = vpop.f32.mrb[0].mxu0
    %v860 = vadd.f32 %v690, %v859
    %v861 = vpop.f32.mrb[0].mxu0
    %v862 = vpop.f32.mrb[0].mxu0
    %v863 = vpop.f32.mrb[0].mxu0
    %864 = vdwg.mxu0
    %v865 = vmul.f32 %v737, 0.5
    %v866 = vmul.f32 %v739, 0.5
    %v867 = vmul.f32 %v778, 0.5
    %v868 = vmul.f32 %v780, 0.5
    %v869 = vmul.f32 %v819, 0.5
    %v870 = vmul.f32 %v821, 0.5
    %v871 = vmul.f32 %v860, 0.5
    %v872 = vtanh.pop %v865
    %v873 = vtanh.pop %v866
    %v874 = vtanh.pop %v867
    %v875 = vtanh.pop %v868
    %v876 = vtanh.pop %v869
    %v877 = vtanh.pop %v870
    %v878 = vtanh.pop %v871
    %v879 = vadd.f32 %v872, 1.0
    %v880 = vadd.f32 %v873, 1.0
    %v881 = vadd.f32 %v874, 1.0
    %v882 = vadd.f32 %v875, 1.0
    %v883 = vadd.f32 %v876, 1.0
    %v884 = vadd.f32 %v877, 1.0
    %v885 = vadd.f32 %v878, 1.0
    %v886 = vmul.f32 %v879, 0.5
    %v887 = vmul.f32 %v880, 0.5
    %v888 = vmul.f32 %v881, 0.5
    %v889 = vmul.f32 %v882, 0.5
    %v890 = vmul.f32 %v883, 0.5
    %v891 = vmul.f32 %v884, 0.5
    %v892 = vmul.f32 %v885, 0.5
    %v900 = vcombine.low %v886, %v887
    %v901 = vcombine.low %v888, %v889
    %v902 = vcombine.low %v890, %v891
    %v904 = vunpack.c.l.s4 1966171168
    %v905 = vunpack.c.0.s8 %v904
    %v906 = vlaneseq
    %v907 = vshrl.u32 %v906, 7
    %v908 = vsub.s32 %v905, %v907
    %v909 = vrot.slane %v900, %v908
    %v911 = vunpack.c.l.s4 1966171168
    %v912 = vunpack.c.0.s8 %v911
    %v913 = vlaneseq
    %v914 = vshrl.u32 %v913, 7
    %v915 = vsub.s32 %v912, %v914
    %v916 = vrot.slane %v901, %v915
    %v918 = vunpack.c.l.s4 1966171168
    %v919 = vunpack.c.0.s8 %v918
    %v920 = vlaneseq
    %v921 = vshrl.u32 %v920, 7
    %v922 = vsub.s32 %v919, %v921
    %v923 = vrot.slane %v902, %v922
    %v925 = vunpack.c.l.s4 1966171168
    %v926 = vunpack.c.0.s8 %v925
    %v927 = vlaneseq
    %v928 = vshrl.u32 %v927, 7
    %v929 = vsub.s32 %v926, %v928
    %v930 = vrot.slane %v892, %v929
    %v931 = vcombine.low %v909, %v916
    %v932 = vcombine.low %v923, %v930
    %v934 = vunpack.c.l.s4 1966171168
    %v935 = vunpack.c.0.s8 %v934
    %v936 = vlaneseq
    %v937 = vshrl.u32 %v936, 7
    %v938 = vsub.s32 %v935, %v937
    %v939 = vrot.slane %v931, %v938
    %v941 = vunpack.c.l.s4 1966171168
    %v942 = vunpack.c.0.s8 %v941
    %v943 = vlaneseq
    %v944 = vshrl.u32 %v943, 7
    %v945 = vsub.s32 %v942, %v944
    %v946 = vrot.slane %v932, %v945
    %v947 = vcombine.low %v939, %v946
    %v949 = vlaneseq
    %vm950 = vcmp.ge.s32.totalorder %v949, 0
    %vm951 = vcmp.lt.s32.totalorder %v949, 896
    %vm952 = vmand %vm950, %vm951
    %953 = vst.msk [vmem:[#allocation5] sm:$0x7f] %vm952, %v947
    // Predicated region
    $region18: #{relu_conv1x1_sigmoid.1} parent=1 // pred_check
      _
    $region19: #{relu_conv1x1_sigmoid.1} parent=1 // pred_check_branch
      %955 = sbr.rel (0) target = $region21
    $region20: #{relu_conv1x1_sigmoid.1} parent=1 // pred_region
      %s957 = ssub.s32 112, 112
      %958 = vsyncadd [#allocation4], %s957
      %s960 = sshll.u32 [#allocation5], 4
      %s961 = int_to_ptr.vmem [resolvable:$true] %s960
      %963 = dma.vmem_to_hbm [thread:$0]  %s961, 112, %s3, [#allocation4]
    $region21: #{relu_conv1x1_sigmoid.1} parent=1 // pred_fallthru
      _
    // Predicated region
    $region22: #{relu_conv1x1_sigmoid.1} parent=1 // pred_check
      _
    $region23: #{relu_conv1x1_sigmoid.1} parent=1 // pred_check_branch
      %965 = sbr.rel (0) target = $region25
    $region24: #{relu_conv1x1_sigmoid.1} parent=1 // pred_region
      %966 = dma.done [#allocation4], 112
    $region25: #{relu_conv1x1_sigmoid.1} parent=1 // pred_fallthru
      _
    %967 = vsyncpa [#allocation3], 1
    %968 = vsyncpa [#allocation4], 1

</llo_original>
